<compile_context>
chip_gen: v7x
topology: tpu7x:2x2x1
jax: 0.10.0
libtpu: 0.0.40
codegen_flags: <defaults>
</compile_context>

<pallas_src>
import functools

import numpy as np
import jax
import jax.numpy as jnp
from jax.experimental import pallas as pl
from jax.experimental.pallas import tpu as pltpu


def _round_up(x, m):
    return ((x + m - 1) // m) * m


# ----------------------------- fused Pallas kernel --------------------------

def _fused_mlp_kernel(*refs, n_layers, out_sizes, apply_softmax):
    """refs = (x, w0, b0, ..., w{L-1}, b{L-1}, [onehot, onehot_T,] out)."""
    x_ref = refs[0]
    o_ref = refs[-1]

    h = x_ref[...]                                        # f32 activations
    for l in range(n_layers):
        w = refs[1 + 2 * l][...]                          # bf16 padded weight
        b = refs[2 + 2 * l][...]                          # f32 (1, out_p) bias
        # bf16 MXU inputs, f32 accumulation; elementwise math stays f32 (VPU).
        h = jnp.dot(h.astype(jnp.bfloat16), w,
                    preferred_element_type=jnp.float32) + b
        if l < n_layers - 1:
            h = jnp.maximum(h, 0.0)                       # hidden layers: ReLU

    if not apply_softmax:
        o_ref[...] = h
        return

    oh_ref = refs[1 + 2 * n_layers]                       # (Op, Kp) segment one-hot
    oht_ref = refs[2 + 2 * n_layers]                      # (Kp, Op) its transpose

    out_total = sum(out_sizes)
    Op = h.shape[-1]
    lanes = jax.lax.broadcasted_iota(jnp.int32, (1, Op), 1)
    valid = lanes < out_total                             # real (non-padded) lanes

    # Per-lane broadcast of each segment's max (K XLU maxes + VPU selects).
    m_b = jnp.zeros_like(h)
    start = 0
    for sz in out_sizes:
        mask = (lanes >= start) & (lanes < start + sz)
        m_k = jnp.max(jnp.where(mask, h, -jnp.inf), axis=-1, keepdims=True)
        m_b = jnp.where(mask, m_k, m_b)
        start += sz

    # ONE exp over the whole slab (EUP); padded lanes contribute exactly 0.
    e = jnp.where(valid, jnp.exp(h - m_b), 0.0)

    # Per-segment sums and per-lane scale via one-hot matmuls (MXU slot).
    s = jnp.dot(e, oh_ref[...], preferred_element_type=jnp.float32)        # (TB, Kp)
    pos = s > 0.0
    inv = jnp.where(pos, pl.reciprocal(jnp.where(pos, s, 1.0), approx=False), 0.0)
    scale = jnp.dot(inv, oht_ref[...], preferred_element_type=jnp.float32)  # (TB, Op)
    o_ref[...] = e * scale


# ------------------------------ host wrapper ---------------------------------

def _make_apply(dims, out_sizes, output, max_padded):
    """Builds a jitted (x, padded_params) -> (B, sum(out_sizes)) function."""
    n_layers = len(dims) - 1
    apply_softmax = (output == 'softmax')
    Fp = _round_up(dims[0], 128)
    Op = _round_up(dims[-1], 128)
    out_total = dims[-1]

    kernel = functools.partial(_fused_mlp_kernel,
                               n_layers=n_layers,
                               out_sizes=tuple(out_sizes),
                               apply_softmax=apply_softmax)

    def apply(x, params):
        B = x.shape[0]
        B8 = _round_up(B, 8)
        # Batch tile: aim for >=2 grid steps (v7x has 2 TCs; axis is "parallel"),
        # cap the tile when layers are wide (v7x 64 MiB VMEM).
        tb_cap = 256 if max_padded >= 2048 else 512
        if B8 <= 8:
            TB = 8
        else:
            TB = min(tb_cap, _round_up(pl.cdiv(B8, 2), 8))
        Bp = _round_up(B8, TB)

        # pad input to lane/sublane-dense shape (zeros elsewhere)
        xp = jnp.zeros((Bp, Fp), jnp.float32).at[:B, :dims[0]].set(
            x.astype(jnp.float32))

        # weights / biases / one-hot: constant index_map, single-buffered,
        # VMEM-resident for the whole grid.
        resident = pl.Buffered(1)
        in_specs = [pl.BlockSpec((TB, Fp), lambda i: (i, 0))]
        resident_bytes = 0
        for p in params:
            in_specs.append(pl.BlockSpec(p.shape, lambda i: (0, 0),
                                         pipeline_mode=resident))
            resident_bytes += p.size * p.dtype.itemsize

        # Explicit VMEM budget: resident params + double-buffered in/out tiles
        # + live activations / temporaries, with headroom; capped for v7x.
        vmem = resident_bytes
        vmem += 2 * TB * Fp * 4 + 2 * TB * Op * 4
        vmem += 4 * TB * max_padded * 4
        vmem = int(vmem * 1.5) + (4 << 20)
        vmem = max(16 << 20, min(vmem, 64 << 20))

        yp = pl.pallas_call(
            kernel,
            out_shape=jax.ShapeDtypeStruct((Bp, Op), jnp.float32),
            grid=(Bp // TB,),
            in_specs=in_specs,
            out_specs=pl.BlockSpec((TB, Op), lambda i: (i, 0)),
            compiler_params=pltpu.CompilerParams(
                dimension_semantics=("parallel",),
                vmem_limit_bytes=vmem),
        )(xp, *params)

        return yp[:B, :out_total]

    return jax.jit(apply)


class DNN:
    """JAX/Pallas port of the PyTorch DNN module's forward pass."""

    def __init__(self, in_size, out_sizes, output, hidden, bias=True, key=None):
        assert all(k > 0 for k in out_sizes), "out_sizes entries must be > 0"
        self.dims = [in_size] + list(hidden) + [sum(out_sizes)]
        self.output = output
        self.out_sizes = list(out_sizes)
        self.bias = bias

        if key is None:
            key = jax.random.PRNGKey(0)
        self.weights, self.biases = [], []
        for i in range(len(self.dims) - 1):
            fan_in, fan_out = self.dims[i], self.dims[i + 1]
            key, kw, kb = jax.random.split(key, 3)
            bound = 1.0 / float(np.sqrt(fan_in))
            # stored as (in, out) so forward is x @ W + b
            w = jax.random.uniform(kw, (fan_in, fan_out), jnp.float32, -bound, bound)
            if bias:
                b = jax.random.uniform(kb, (1, fan_out), jnp.float32, -bound, bound)
            else:
                b = jnp.zeros((1, fan_out), jnp.float32)
            self.weights.append(w)
            self.biases.append(b)

        padded = [_round_up(d, 128) for d in self.dims]
        self._max_padded = max(padded)

        # Pad params ONCE at init.  Zero-padded rows/cols + zero bias lanes keep
        # padded activation lanes exactly 0 through every layer.  Weights are
        # stored bf16 (MXU-native, half the DMA/VMEM bytes); biases stay f32.
        params = []
        for l in range(len(self.dims) - 1):
            wp = jnp.zeros((padded[l], padded[l + 1]), jnp.float32)
            wp = wp.at[:self.dims[l], :self.dims[l + 1]].set(self.weights[l])
            bp = jnp.zeros((1, padded[l + 1]), jnp.float32)
            bp = bp.at[:, :self.dims[l + 1]].set(self.biases[l])
            params += [wp.astype(jnp.bfloat16), bp]

        if output == 'softmax':
            Op = padded[-1]
            Kp = _round_up(len(self.out_sizes), 128)
            oh = np.zeros((Op, Kp), np.float32)
            start = 0
            for k, sz in enumerate(self.out_sizes):
                oh[start:start + sz, k] = 1.0
                start += sz
            params += [jnp.asarray(oh), jnp.asarray(np.ascontiguousarray(oh.T))]

        self._params = tuple(params)

        if output in ('linear', 'softmax'):
            self._apply = _make_apply(self.dims, self.out_sizes, output,
                                      self._max_padded)
        else:
            self._apply = None

    def forward(self, x):
        if self.output not in ('linear', 'softmax'):
            print("Error: DNN output must be 'linear' or 'softmax'")
            return None

        x = jnp.asarray(x, jnp.float32)
        squeeze = (x.ndim == 1)               # support 1-D input like nn.Linear
        if squeeze:
            x = x[None, :]

        y = self._apply(x, self._params)      # one fused kernel launch

        if self.output == 'linear':
            return y[0] if squeeze else y
        # softmax: kernel already normalized each split; just slice it apart
        outs, start = [], 0
        for k in self.out_sizes:
            chunk = y[:, start:start + k]
            outs.append(chunk[0] if squeeze else chunk)
            start += k
        return outs

    __call__ = forward


# --------------------------------- driver -----------------------------------

if __name__ == "__main__":
    key = jax.random.PRNGKey(0)
    kx, kp = jax.random.split(key)

    batch = 2
    in_size = 16
    hidden = [32, 32]
    out_sizes = [4, 3]

    x = jax.random.normal(kx, (batch, in_size), jnp.float32)

    # softmax head (fused linear stack + segmented softmax in one kernel)
    model = DNN(in_size, out_sizes, output='softmax', hidden=hidden, bias=True, key=kp)
    outs = model(x)
    outs = [jax.block_until_ready(o) for o in outs]

    # pure-JAX reference mirroring the kernel's bf16-input / f32-accum matmuls
    def ref_forward(xv):
        h = xv.astype(jnp.float32)
        nl = len(model.weights)
        for i, (w, b) in enumerate(zip(model.weights, model.biases)):
            h = jnp.dot(h.astype(jnp.bfloat16), w.astype(jnp.bfloat16),
                        preferred_element_type=jnp.float32) + b
            if i < nl - 1:
                h = jnp.maximum(h, 0.0)
        res, start = [], 0
        for k in out_sizes:
            res.append(jax.nn.softmax(h[:, start:start + k], axis=1))
            start += k
        return res, h

    refs, ref_logits = ref_forward(x)
    for o, r in zip(outs, refs):
        assert o.shape == r.shape
        assert float(jnp.max(jnp.abs(o - r))) < 2e-3, "softmax mismatch vs reference"

    # linear head path (same params: same key)
    model_lin = DNN(in_size, out_sizes, output='linear', hidden=hidden, bias=True, key=kp)
    y = jax.block_until_ready(model_lin(x))
    assert y.shape == (batch, sum(out_sizes))
    assert float(jnp.max(jnp.abs(y - ref_logits))) < 2e-3, "linear mismatch vs reference"

    print("KERNEL_OK")
</pallas_src>

<mosaic_0001>
module attributes {stable_mosaic.version = 11 : i64} {
  func.func @_fused_mlp_kernel(%arg0: i32, %arg1: memref<8x128xf32, #tpu.memory_space<vmem>>, %arg2: memref<128x128xbf16, #tpu.memory_space<vmem>>, %arg3: memref<1x128xf32, #tpu.memory_space<vmem>>, %arg4: memref<128x128xbf16, #tpu.memory_space<vmem>>, %arg5: memref<1x128xf32, #tpu.memory_space<vmem>>, %arg6: memref<128x128xbf16, #tpu.memory_space<vmem>>, %arg7: memref<1x128xf32, #tpu.memory_space<vmem>>, %arg8: memref<128x128xf32, #tpu.memory_space<vmem>>, %arg9: memref<128x128xf32, #tpu.memory_space<vmem>>, %arg10: memref<8x128xf32, #tpu.memory_space<vmem>>) attributes {dimension_semantics = [#tpu.dimension_semantics<parallel>], iteration_bounds = array<i64: 1>, scalar_prefetch = 0 : i64, scratch_operands = 0 : i64, tpu.core_type = #tpu.core_type<tc>, window_params = [{transform_indices = @transform_0, window_bounds = array<i64: 8, 128>}, {pipeline_mode = #tpu.pipeline_mode<synchronous>, transform_indices = @transform_1, window_bounds = array<i64: 128, 128>}, {pipeline_mode = #tpu.pipeline_mode<synchronous>, transform_indices = @transform_2, window_bounds = array<i64: 1, 128>}, {pipeline_mode = #tpu.pipeline_mode<synchronous>, transform_indices = @transform_3, window_bounds = array<i64: 128, 128>}, {pipeline_mode = #tpu.pipeline_mode<synchronous>, transform_indices = @transform_4, window_bounds = array<i64: 1, 128>}, {pipeline_mode = #tpu.pipeline_mode<synchronous>, transform_indices = @transform_5, window_bounds = array<i64: 128, 128>}, {pipeline_mode = #tpu.pipeline_mode<synchronous>, transform_indices = @transform_6, window_bounds = array<i64: 1, 128>}, {pipeline_mode = #tpu.pipeline_mode<synchronous>, transform_indices = @transform_7, window_bounds = array<i64: 128, 128>}, {pipeline_mode = #tpu.pipeline_mode<synchronous>, transform_indices = @transform_8, window_bounds = array<i64: 128, 128>}, {transform_indices = @transform_9, window_bounds = array<i64: 8, 128>}]} {
    %c0 = arith.constant 0 : index
    %c0_0 = arith.constant 0 : index
    %0 = vector.load %arg1[%c0, %c0_0] : memref<8x128xf32, #tpu.memory_space<vmem>>, vector<8x128xf32>
    %c0_1 = arith.constant 0 : index
    %c0_2 = arith.constant 0 : index
    %1 = vector.load %arg2[%c0_1, %c0_2] : memref<128x128xbf16, #tpu.memory_space<vmem>>, vector<128x128xbf16>
    %c0_3 = arith.constant 0 : index
    %c0_4 = arith.constant 0 : index
    %2 = vector.load %arg3[%c0_3, %c0_4] : memref<1x128xf32, #tpu.memory_space<vmem>>, vector<1x128xf32>
    %3 = arith.truncf %0 : vector<8x128xf32> to vector<8x128xbf16>
    %cst = arith.constant dense<0.000000e+00> : vector<8x128xf32>
    %4 = tpu.matmul %3, %1, %cst {dimension_numbers = #tpu.dot_dimension_numbers<[1], [0], [0], [1], [0, 0, 1, 1], [], []>} : vector<8x128xbf16>, vector<128x128xbf16>, vector<8x128xf32> -> vector<8x128xf32>
    %5 = vector.broadcast %2 : vector<1x128xf32> to vector<8x128xf32>
    %6 = arith.addf %4, %5 : vector<8x128xf32>
    %cst_5 = arith.constant 0.000000e+00 : f32
    %7 = vector.broadcast %cst_5 : f32 to vector<8x128xf32>
    %8 = arith.maximumf %6, %7 : vector<8x128xf32>
    %c0_6 = arith.constant 0 : index
    %c0_7 = arith.constant 0 : index
    %9 = vector.load %arg4[%c0_6, %c0_7] : memref<128x128xbf16, #tpu.memory_space<vmem>>, vector<128x128xbf16>
    %c0_8 = arith.constant 0 : index
    %c0_9 = arith.constant 0 : index
    %10 = vector.load %arg5[%c0_8, %c0_9] : memref<1x128xf32, #tpu.memory_space<vmem>>, vector<1x128xf32>
    %11 = arith.truncf %8 : vector<8x128xf32> to vector<8x128xbf16>
    %cst_10 = arith.constant dense<0.000000e+00> : vector<8x128xf32>
    %12 = tpu.matmul %11, %9, %cst_10 {dimension_numbers = #tpu.dot_dimension_numbers<[1], [0], [0], [1], [0, 0, 1, 1], [], []>} : vector<8x128xbf16>, vector<128x128xbf16>, vector<8x128xf32> -> vector<8x128xf32>
    %13 = vector.broadcast %10 : vector<1x128xf32> to vector<8x128xf32>
    %14 = arith.addf %12, %13 : vector<8x128xf32>
    %cst_11 = arith.constant 0.000000e+00 : f32
    %15 = vector.broadcast %cst_11 : f32 to vector<8x128xf32>
    %16 = arith.maximumf %14, %15 : vector<8x128xf32>
    %c0_12 = arith.constant 0 : index
    %c0_13 = arith.constant 0 : index
    %17 = vector.load %arg6[%c0_12, %c0_13] : memref<128x128xbf16, #tpu.memory_space<vmem>>, vector<128x128xbf16>
    %c0_14 = arith.constant 0 : index
    %c0_15 = arith.constant 0 : index
    %18 = vector.load %arg7[%c0_14, %c0_15] : memref<1x128xf32, #tpu.memory_space<vmem>>, vector<1x128xf32>
    %19 = arith.truncf %16 : vector<8x128xf32> to vector<8x128xbf16>
    %cst_16 = arith.constant dense<0.000000e+00> : vector<8x128xf32>
    %20 = tpu.matmul %19, %17, %cst_16 {dimension_numbers = #tpu.dot_dimension_numbers<[1], [0], [0], [1], [0, 0, 1, 1], [], []>} : vector<8x128xbf16>, vector<128x128xbf16>, vector<8x128xf32> -> vector<8x128xf32>
    %21 = vector.broadcast %18 : vector<1x128xf32> to vector<8x128xf32>
    %22 = arith.addf %20, %21 : vector<8x128xf32>
    %23 = tpu.iota {dimensions = array<i32: 1>} : vector<1x128xi32>
    %c7_i32 = arith.constant 7 : i32
    %24 = vector.broadcast %c7_i32 : i32 to vector<1x128xi32>
    %25 = arith.cmpi slt, %23, %24 : vector<1x128xi32>
    %cst_17 = arith.constant 0.000000e+00 : f32
    %26 = vector.broadcast %cst_17 : f32 to vector<8x128xf32>
    %c0_i32 = arith.constant 0 : i32
    %27 = vector.broadcast %c0_i32 : i32 to vector<1x128xi32>
    %28 = arith.cmpi sge, %23, %27 : vector<1x128xi32>
    %c4_i32 = arith.constant 4 : i32
    %29 = vector.broadcast %c4_i32 : i32 to vector<1x128xi32>
    %30 = arith.cmpi slt, %23, %29 : vector<1x128xi32>
    %31 = arith.andi %28, %30 : vector<1x128xi1>
    %cst_18 = arith.constant 0xFF800000 : f32
    %32 = vector.shape_cast %31 : vector<1x128xi1> to vector<1x128xi1>
    %33 = vector.broadcast %32 : vector<1x128xi1> to vector<8x128xi1>
    %34 = vector.broadcast %cst_18 : f32 to vector<8x128xf32>
    %35 = arith.select %33, %22, %34 : vector<8x128xi1>, vector<8x128xf32>
    %cst_19 = arith.constant dense<0xFF800000> : vector<8xf32>
    %36 = vector.multi_reduction <maximumf>, %35, %cst_19 [1] : vector<8x128xf32> to vector<8xf32>
    %37 = vector.shape_cast %36 : vector<8xf32> to vector<8x1xf32>
    %38 = vector.shape_cast %31 : vector<1x128xi1> to vector<1x128xi1>
    %39 = vector.broadcast %38 : vector<1x128xi1> to vector<8x128xi1>
    %40 = vector.shape_cast %37 : vector<8x1xf32> to vector<8x1xf32>
    %41 = vector.broadcast %40 : vector<8x1xf32> to vector<8x128xf32>
    %42 = arith.select %39, %41, %26 : vector<8x128xi1>, vector<8x128xf32>
    %c4_i32_20 = arith.constant 4 : i32
    %43 = vector.broadcast %c4_i32_20 : i32 to vector<1x128xi32>
    %44 = arith.cmpi sge, %23, %43 : vector<1x128xi32>
    %c7_i32_21 = arith.constant 7 : i32
    %45 = vector.broadcast %c7_i32_21 : i32 to vector<1x128xi32>
    %46 = arith.cmpi slt, %23, %45 : vector<1x128xi32>
    %47 = arith.andi %44, %46 : vector<1x128xi1>
    %cst_22 = arith.constant 0xFF800000 : f32
    %48 = vector.shape_cast %47 : vector<1x128xi1> to vector<1x128xi1>
    %49 = vector.broadcast %48 : vector<1x128xi1> to vector<8x128xi1>
    %50 = vector.broadcast %cst_22 : f32 to vector<8x128xf32>
    %51 = arith.select %49, %22, %50 : vector<8x128xi1>, vector<8x128xf32>
    %cst_23 = arith.constant dense<0xFF800000> : vector<8xf32>
    %52 = vector.multi_reduction <maximumf>, %51, %cst_23 [1] : vector<8x128xf32> to vector<8xf32>
    %53 = vector.shape_cast %52 : vector<8xf32> to vector<8x1xf32>
    %54 = vector.shape_cast %47 : vector<1x128xi1> to vector<1x128xi1>
    %55 = vector.broadcast %54 : vector<1x128xi1> to vector<8x128xi1>
    %56 = vector.shape_cast %53 : vector<8x1xf32> to vector<8x1xf32>
    %57 = vector.broadcast %56 : vector<8x1xf32> to vector<8x128xf32>
    %58 = arith.select %55, %57, %42 : vector<8x128xi1>, vector<8x128xf32>
    %59 = arith.subf %22, %58 : vector<8x128xf32>
    %60 = math.exp %59 : vector<8x128xf32>
    %cst_24 = arith.constant 0.000000e+00 : f32
    %61 = vector.shape_cast %25 : vector<1x128xi1> to vector<1x128xi1>
    %62 = vector.broadcast %61 : vector<1x128xi1> to vector<8x128xi1>
    %63 = vector.broadcast %cst_24 : f32 to vector<8x128xf32>
    %64 = arith.select %62, %60, %63 : vector<8x128xi1>, vector<8x128xf32>
    %c0_25 = arith.constant 0 : index
    %c0_26 = arith.constant 0 : index
    %65 = vector.load %arg8[%c0_25, %c0_26] : memref<128x128xf32, #tpu.memory_space<vmem>>, vector<128x128xf32>
    %cst_27 = arith.constant dense<0.000000e+00> : vector<8x128xf32>
    %66 = tpu.matmul %64, %65, %cst_27 {dimension_numbers = #tpu.dot_dimension_numbers<[1], [0], [0], [1], [0, 0, 1, 1], [], []>} : vector<8x128xf32>, vector<128x128xf32>, vector<8x128xf32> -> vector<8x128xf32>
    %cst_28 = arith.constant 0.000000e+00 : f32
    %67 = vector.broadcast %cst_28 : f32 to vector<8x128xf32>
    %68 = arith.cmpf ogt, %66, %67 : vector<8x128xf32>
    %cst_29 = arith.constant 1.000000e+00 : f32
    %69 = vector.broadcast %cst_29 : f32 to vector<8x128xf32>
    %70 = arith.select %68, %66, %69 : vector<8x128xi1>, vector<8x128xf32>
    %71 = tpu.reciprocal %70 : vector<8x128xf32> -> vector<8x128xf32>
    %cst_30 = arith.constant 0.000000e+00 : f32
    %72 = vector.broadcast %cst_30 : f32 to vector<8x128xf32>
    %73 = arith.select %68, %71, %72 : vector<8x128xi1>, vector<8x128xf32>
    %c0_31 = arith.constant 0 : index
    %c0_32 = arith.constant 0 : index
    %74 = vector.load %arg9[%c0_31, %c0_32] : memref<128x128xf32, #tpu.memory_space<vmem>>, vector<128x128xf32>
    %cst_33 = arith.constant dense<0.000000e+00> : vector<8x128xf32>
    %75 = tpu.matmul %73, %74, %cst_33 {dimension_numbers = #tpu.dot_dimension_numbers<[1], [0], [0], [1], [0, 0, 1, 1], [], []>} : vector<8x128xf32>, vector<128x128xf32>, vector<8x128xf32> -> vector<8x128xf32>
    %76 = arith.mulf %64, %75 : vector<8x128xf32>
    %c0_34 = arith.constant 0 : index
    %c0_35 = arith.constant 0 : index
    %77 = vector.load %arg10[%c0_34, %c0_35] : memref<8x128xf32, #tpu.memory_space<vmem>>, vector<8x128xf32>
    tpu.vector_store %arg10[%c0_34, %c0_35], %76 {strides = array<i32>} : memref<8x128xf32, #tpu.memory_space<vmem>>, vector<8x128xf32>,
    return
  }
  func.func @transform_0(%arg0: i32) -> (i32, i32) {
    %c0_i32 = arith.constant 0 : i32
    %c0_i32_0 = arith.constant 0 : i32
    return %arg0, %c0_i32 : i32, i32
  }
  func.func @transform_1(%arg0: i32) -> (i32, i32) {
    %c0_i32 = arith.constant 0 : i32
    %c0_i32_0 = arith.constant 0 : i32
    %c0_i32_1 = arith.constant 0 : i32
    return %c0_i32, %c0_i32_0 : i32, i32
  }
  func.func @transform_2(%arg0: i32) -> (i32, i32) {
    %c0_i32 = arith.constant 0 : i32
    %c0_i32_0 = arith.constant 0 : i32
    %c0_i32_1 = arith.constant 0 : i32
    return %c0_i32, %c0_i32_0 : i32, i32
  }
  func.func @transform_3(%arg0: i32) -> (i32, i32) {
    %c0_i32 = arith.constant 0 : i32
    %c0_i32_0 = arith.constant 0 : i32
    %c0_i32_1 = arith.constant 0 : i32
    return %c0_i32, %c0_i32_0 : i32, i32
  }
  func.func @transform_4(%arg0: i32) -> (i32, i32) {
    %c0_i32 = arith.constant 0 : i32
    %c0_i32_0 = arith.constant 0 : i32
    %c0_i32_1 = arith.constant 0 : i32
    return %c0_i32, %c0_i32_0 : i32, i32
  }
  func.func @transform_5(%arg0: i32) -> (i32, i32) {
    %c0_i32 = arith.constant 0 : i32
    %c0_i32_0 = arith.constant 0 : i32
    %c0_i32_1 = arith.constant 0 : i32
    return %c0_i32, %c0_i32_0 : i32, i32
  }
  func.func @transform_6(%arg0: i32) -> (i32, i32) {
    %c0_i32 = arith.constant 0 : i32
    %c0_i32_0 = arith.constant 0 : i32
    %c0_i32_1 = arith.constant 0 : i32
    return %c0_i32, %c0_i32_0 : i32, i32
  }
  func.func @transform_7(%arg0: i32) -> (i32, i32) {
    %c0_i32 = arith.constant 0 : i32
    %c0_i32_0 = arith.constant 0 : i32
    %c0_i32_1 = arith.constant 0 : i32
    return %c0_i32, %c0_i32_0 : i32, i32
  }
  func.func @transform_8(%arg0: i32) -> (i32, i32) {
    %c0_i32 = arith.constant 0 : i32
    %c0_i32_0 = arith.constant 0 : i32
    %c0_i32_1 = arith.constant 0 : i32
    return %c0_i32, %c0_i32_0 : i32, i32
  }
  func.func @transform_9(%arg0: i32) -> (i32, i32) {
    %c0_i32 = arith.constant 0 : i32
    %c0_i32_0 = arith.constant 0 : i32
    return %arg0, %c0_i32 : i32, i32
  }
}

</mosaic_0001>

<llo_original>
// kernel: apply.1
$region0: #{apply.1}
  #allocation0 [shape = 'u32[]', space=smem, size = 0x4, offset = 0x4, fixed_abs, tag = 'smem constant byte address 0x4 - core index']
  #allocation1 [shape = 'u32[144,128]{1,0:T(1,128)}', space=vmem, size = 0x12000, scoped, tag = 'internal scratch']
  %s0 = inlined_call_operand.vmem [shape: f32[8,128], index: 0, kind: input, shape index: {}]
  %s1 = inlined_call_operand.hbm [shape: bf16[128,128], index: 1, kind: input, shape index: {}]
  %s2 = inlined_call_operand.vmem [shape: f32[1,128], index: 2, kind: input, shape index: {}]
  %s3 = inlined_call_operand.hbm [shape: bf16[128,128], index: 3, kind: input, shape index: {}]
  %s4 = inlined_call_operand.vmem [shape: f32[1,128], index: 4, kind: input, shape index: {}]
  %s5 = inlined_call_operand.hbm [shape: bf16[128,128], index: 5, kind: input, shape index: {}]
  %s6 = inlined_call_operand.vmem [shape: f32[1,128], index: 6, kind: input, shape index: {}]
  %s7 = inlined_call_operand.hbm [shape: f32[128,128], index: 7, kind: input, shape index: {}]
  %s8 = inlined_call_operand.hbm [shape: f32[128,128], index: 8, kind: input, shape index: {}]
  %s9 = inlined_call_operand.vmem [shape: f32[8,128], index: 9, kind: output, shape index: {}]
  %s10 = sld [smem:[#allocation0]]
  $region66: #{apply.1} parent=0
    _
  %s12 = ssub.s32 1, %s10
  %s13 = scalar_select 0, %s12, %s10
  $region1: #{apply.1} parent=0
    #allocation2 [shape = 'u8[32768]{0}', space=vmem, size = 0x8000, scoped, tag = 'input window, operand 1, single buffered']
    #allocation3 [shape = 's32[1]{0}', space=sflag, size = 0x4, scoped, tag = 'scoped memory for apply.1']
    #allocation4 [shape = 'u8[32768]{0}', space=vmem, size = 0x8000, scoped, tag = 'input window, operand 3, single buffered']
    #allocation5 [shape = 's32[1]{0}', space=sflag, size = 0x4, scoped, tag = 'scoped memory for apply.1']
    #allocation6 [shape = 'u8[32768]{0}', space=vmem, size = 0x8000, scoped, tag = 'input window, operand 5, single buffered']
    #allocation7 [shape = 'u8[65536]{0}', space=vmem, size = 0x10000, scoped, tag = 'input window, operand 7, single buffered']
    #allocation8 [shape = 's32[1]{0}', space=sflag, size = 0x4, scoped, tag = 'scoped memory for apply.1']
    #allocation9 [shape = 'u8[65536]{0}', space=vmem, size = 0x10000, scoped, tag = 'input window, operand 8, single buffered']
    %14 = vsyncpa [#allocation3], 0
    %15 = vsyncpa [#allocation5], 0
    %16 = vsyncpa [#allocation8], 0
    // Predicated region
    $region2: #{apply.1} parent=1 // pred_check
      _
    $region3: #{apply.1} parent=1 // pred_check_branch
      %18 = sbr.rel (0) target = $region5
    $region4: #{apply.1} parent=1 // pred_region
      _
    $region5: #{apply.1} parent=1 // pred_fallthru
      _
    // Predicated region
    $region6: #{apply.1} parent=1 // pred_check
      _
    $region7: #{apply.1} parent=1 // pred_check_branch
      %20 = sbr.rel (0) target = $region9
    $region8: #{apply.1} parent=1 // pred_region
      %s22 = ssub.s32 1024, 1024
      %23 = vsyncadd [#allocation3], %s22
      %s24 = sshll.u32 [#allocation2], 4
      %s25 = int_to_ptr.vmem [resolvable:$true] %s24
      %30 = dma.hbm_to_vmem [thread:$0]  %s1, 1024, %s25, [#allocation3], 64, 64, 4
    $region9: #{apply.1} parent=1 // pred_fallthru
      _
    // Predicated region
    $region10: #{apply.1} parent=1 // pred_check
      _
    $region11: #{apply.1} parent=1 // pred_check_branch
      %32 = sbr.rel (0) target = $region13
    $region12: #{apply.1} parent=1 // pred_region
      _
    $region13: #{apply.1} parent=1 // pred_fallthru
      _
    // Predicated region
    $region14: #{apply.1} parent=1 // pred_check
      _
    $region15: #{apply.1} parent=1 // pred_check_branch
      %34 = sbr.rel (0) target = $region17
    $region16: #{apply.1} parent=1 // pred_region
      %s36 = ssub.s32 1024, 1024
      %37 = vsyncadd [#allocation5], %s36
      %s38 = sshll.u32 [#allocation4], 4
      %s39 = int_to_ptr.vmem [resolvable:$true] %s38
      %44 = dma.hbm_to_vmem [thread:$0]  %s3, 1024, %s39, [#allocation5], 64, 64, 4
    $region17: #{apply.1} parent=1 // pred_fallthru
      _
    // Predicated region
    $region18: #{apply.1} parent=1 // pred_check
      _
    $region19: #{apply.1} parent=1 // pred_check_branch
      %46 = sbr.rel (0) target = $region21
    $region20: #{apply.1} parent=1 // pred_region
      _
    $region21: #{apply.1} parent=1 // pred_fallthru
      _
    // Predicated region
    $region22: #{apply.1} parent=1 // pred_check
      _
    $region23: #{apply.1} parent=1 // pred_check_branch
      %48 = sbr.rel (0) target = $region25
    $region24: #{apply.1} parent=1 // pred_region
      %s50 = ssub.s32 1024, 1024
      %51 = vsyncadd [#allocation5], %s50
      %s52 = sshll.u32 [#allocation6], 4
      %s53 = int_to_ptr.vmem [resolvable:$true] %s52
      %58 = dma.hbm_to_vmem [thread:$0]  %s5, 1024, %s53, [#allocation5], 64, 64, 4
    $region25: #{apply.1} parent=1 // pred_fallthru
      _
    // Predicated region
    $region26: #{apply.1} parent=1 // pred_check
      _
    $region27: #{apply.1} parent=1 // pred_check_branch
      %60 = sbr.rel (0) target = $region29
    $region28: #{apply.1} parent=1 // pred_region
      _
    $region29: #{apply.1} parent=1 // pred_fallthru
      _
    // Predicated region
    $region30: #{apply.1} parent=1 // pred_check
      _
    $region31: #{apply.1} parent=1 // pred_check_branch
      %62 = sbr.rel (0) target = $region33
    $region32: #{apply.1} parent=1 // pred_region
      %s64 = ssub.s32 2048, 2048
      %65 = vsyncadd [#allocation8], %s64
      %s66 = sshll.u32 [#allocation7], 4
      %s67 = int_to_ptr.vmem [resolvable:$true] %s66
      %72 = dma.hbm_to_vmem [thread:$0]  %s7, 2048, %s67, [#allocation8], 128, 128, 8
    $region33: #{apply.1} parent=1 // pred_fallthru
      _
    // Predicated region
    $region34: #{apply.1} parent=1 // pred_check
      _
    $region35: #{apply.1} parent=1 // pred_check_branch
      %74 = sbr.rel (0) target = $region37
    $region36: #{apply.1} parent=1 // pred_region
      %s76 = ssub.s32 2048, 2048
      %77 = vsyncadd [#allocation8], %s76
      %s78 = sshll.u32 [#allocation9], 4
      %s79 = int_to_ptr.vmem [resolvable:$true] %s78
      %84 = dma.hbm_to_vmem [thread:$0]  %s8, 2048, %s79, [#allocation8], 128, 128, 8
    $region37: #{apply.1} parent=1 // pred_fallthru
      _
    // Predicated region
    $region38: #{apply.1} parent=1 // pred_check
      _
    $region39: #{apply.1} parent=1 // pred_check_branch
      %86 = sbr.rel (0) target = $region41
    $region40: #{apply.1} parent=1 // pred_region
      %87 = dma.done [#allocation3], 1024
    $region41: #{apply.1} parent=1 // pred_fallthru
      _
    // Predicated region
    $region42: #{apply.1} parent=1 // pred_check
      _
    $region43: #{apply.1} parent=1 // pred_check_branch
      %89 = sbr.rel (0) target = $region45
    $region44: #{apply.1} parent=1 // pred_region
      %90 = dma.done [#allocation5], 1024
    $region45: #{apply.1} parent=1 // pred_fallthru
      _
    // Predicated region
    $region46: #{apply.1} parent=1 // pred_check
      _
    $region47: #{apply.1} parent=1 // pred_check_branch
      %92 = sbr.rel (0) target = $region49
    $region48: #{apply.1} parent=1 // pred_region
      %93 = dma.done [#allocation5], 1024
    $region49: #{apply.1} parent=1 // pred_fallthru
      _
    // Predicated region
    $region50: #{apply.1} parent=1 // pred_check
      _
    $region51: #{apply.1} parent=1 // pred_check_branch
      %95 = sbr.rel (0) target = $region53
    $region52: #{apply.1} parent=1 // pred_region
      %96 = dma.done [#allocation8], 2048
    $region53: #{apply.1} parent=1 // pred_fallthru
      _
    // Predicated region
    $region54: #{apply.1} parent=1 // pred_check
      _
    $region55: #{apply.1} parent=1 // pred_check_branch
      %98 = sbr.rel (0) target = $region57
    $region56: #{apply.1} parent=1 // pred_region
      %99 = dma.done [#allocation8], 2048
    $region57: #{apply.1} parent=1 // pred_fallthru
      _
    %v101 = vld [vmem:[%s0] sm:$0xff]
    %v102 = vld [vmem:[#allocation2] sm:$0xf]
    %v103 = vld [vmem:[#allocation2 + $0x4] sm:$0xf]
    %v104 = vld [vmem:[#allocation2 + $0x8] sm:$0xf]
    %v105 = vld [vmem:[#allocation2 + $0xc] sm:$0xf]
    %v106 = vld [vmem:[#allocation2 + $0x10] sm:$0xf]
    %v107 = vld [vmem:[#allocation2 + $0x14] sm:$0xf]
    %v108 = vld [vmem:[#allocation2 + $0x18] sm:$0xf]
    %v109 = vld [vmem:[#allocation2 + $0x1c] sm:$0xf]
    %v110 = vld [vmem:[#allocation2 + $0x20] sm:$0xf]
    %v111 = vld [vmem:[#allocation2 + $0x24] sm:$0xf]
    %v112 = vld [vmem:[#allocation2 + $0x28] sm:$0xf]
    %v113 = vld [vmem:[#allocation2 + $0x2c] sm:$0xf]
    %v114 = vld [vmem:[#allocation2 + $0x30] sm:$0xf]
    %v115 = vld [vmem:[#allocation2 + $0x34] sm:$0xf]
    %v116 = vld [vmem:[#allocation2 + $0x38] sm:$0xf]
    %v117 = vld [vmem:[#allocation2 + $0x3c] sm:$0xf]
    %v118 = vld [vmem:[%s2] sm:$0x1]
    %v119 = vpack.c.bf16 %v101, %v101
    %v121 = vlaneseq
    %v122 = vshrl.u32 %v121, 7
    %v123 = vsub.s32 0, %v122
    %v124 = vrot.slane %v118, %v123
    %v142 = vunpack.c.l.b16 %v102
    %v143 = vunpack.c.l.b16 %v103
    %v144 = vunpack.c.l.b16 %v104
    %v145 = vunpack.c.l.b16 %v105
    %v146 = vunpack.c.l.b16 %v106
    %v147 = vunpack.c.l.b16 %v107
    %v148 = vunpack.c.l.b16 %v108
    %v149 = vunpack.c.l.b16 %v109
    %v150 = vunpack.c.l.b16 %v110
    %v151 = vunpack.c.l.b16 %v111
    %v152 = vunpack.c.l.b16 %v112
    %v153 = vunpack.c.l.b16 %v113
    %v154 = vunpack.c.l.b16 %v114
    %v155 = vunpack.c.l.b16 %v115
    %v156 = vunpack.c.l.b16 %v116
    %v157 = vunpack.c.l.b16 %v117
    %v158 = vpack.c.b16 %v143, %v142
    %v159 = vpack.c.b16 %v145, %v144
    %v160 = vpack.c.b16 %v147, %v146
    %v161 = vpack.c.b16 %v149, %v148
    %v162 = vpack.c.b16 %v151, %v150
    %v163 = vpack.c.b16 %v153, %v152
    %v164 = vpack.c.b16 %v155, %v154
    %v165 = vpack.c.b16 %v157, %v156
    %174 = vmatprep.subr.bf16.mxu0 0
    %175 = vmatpush1.bf16.msra.mxu0 %v158
    %176 = vmatprep.subr.bf16.mxu0 0
    %177 = vmatpush1.bf16.msra.mxu0 %v159
    %178 = vmatprep.subr.bf16.mxu0 0
    %179 = vmatpush1.bf16.msra.mxu0 %v160
    %180 = vmatprep.subr.bf16.mxu0 0
    %181 = vmatpush1.bf16.msra.mxu0 %v161
    %182 = vmatprep.subr.bf16.mxu0 0
    %183 = vmatpush1.bf16.msra.mxu0 %v162
    %184 = vmatprep.subr.bf16.mxu0 0
    %185 = vmatpush1.bf16.msra.mxu0 %v163
    %186 = vmatprep.subr.bf16.mxu0 0
    %187 = vmatpush1.bf16.msra.mxu0 %v164
    %188 = vmatprep.subr.bf16.mxu0 0
    %189 = vmatpush1.bf16.msra.mxu0 %v165
    %190 = vmatprep.subr.bf16.mxu0 0
    %191 = vmatpush1.bf16.msra.mxu0 0
    %192 = vmatprep.subr.bf16.mxu0 0
    %193 = vmatpush1.bf16.msra.mxu0 0
    %194 = vmatprep.subr.bf16.mxu0 0
    %195 = vmatpush1.bf16.msra.mxu0 0
    %196 = vmatprep.subr.bf16.mxu0 0
    %197 = vmatpush1.bf16.msra.mxu0 0
    %198 = vmatprep.subr.bf16.mxu0 0
    %199 = vmatpush1.bf16.msra.mxu0 0
    %200 = vmatprep.subr.bf16.mxu0 0
    %201 = vmatpush1.bf16.msra.mxu0 0
    %202 = vmatprep.subr.bf16.mxu0 0
    %203 = vmatpush1.bf16.msra.mxu0 0
    %204 = vmatprep.subr.bf16.mxu0 0
    %205 = vmatpush1.bf16.msra.mxu0 0
    %206 = vmatprep.mubr.bf16.mxu0 0
    %207 = vmatmul.mubr.bf16.gmra.mrb[0].mxu0 %v119
    %v208 = vpop.f32.mrb[0].mxu0
    %v209 = vadd.f32 %v124, %v208
    %v210 = vpop.f32.mrb[0].mxu0
    %v211 = vpop.f32.mrb[0].mxu0
    %v212 = vpop.f32.mrb[0].mxu0
    %213 = vdwg.mxu0
    %v214 = vmax.f32 %v209, 0.0
    %v215 = vld [vmem:[#allocation4] sm:$0xf]
    %v216 = vld [vmem:[#allocation4 + $0x4] sm:$0xf]
    %v217 = vld [vmem:[#allocation4 + $0x8] sm:$0xf]
    %v218 = vld [vmem:[#allocation4 + $0xc] sm:$0xf]
    %v219 = vld [vmem:[#allocation4 + $0x10] sm:$0xf]
    %v220 = vld [vmem:[#allocation4 + $0x14] sm:$0xf]
    %v221 = vld [vmem:[#allocation4 + $0x18] sm:$0xf]
    %v222 = vld [vmem:[#allocation4 + $0x1c] sm:$0xf]
    %v223 = vld [vmem:[#allocation4 + $0x20] sm:$0xf]
    %v224 = vld [vmem:[#allocation4 + $0x24] sm:$0xf]
    %v225 = vld [vmem:[#allocation4 + $0x28] sm:$0xf]
    %v226 = vld [vmem:[#allocation4 + $0x2c] sm:$0xf]
    %v227 = vld [vmem:[#allocation4 + $0x30] sm:$0xf]
    %v228 = vld [vmem:[#allocation4 + $0x34] sm:$0xf]
    %v229 = vld [vmem:[#allocation4 + $0x38] sm:$0xf]
    %v230 = vld [vmem:[#allocation4 + $0x3c] sm:$0xf]
    %v231 = vld [vmem:[%s4] sm:$0x1]
    %v232 = vpack.c.bf16 %v214, %v214
    %v234 = vlaneseq
    %v235 = vshrl.u32 %v234, 7
    %v236 = vsub.s32 0, %v235
    %v237 = vrot.slane %v231, %v236
    %v255 = vunpack.c.l.b16 %v215
    %v256 = vunpack.c.l.b16 %v216
    %v257 = vunpack.c.l.b16 %v217
    %v258 = vunpack.c.l.b16 %v218
    %v259 = vunpack.c.l.b16 %v219
    %v260 = vunpack.c.l.b16 %v220
    %v261 = vunpack.c.l.b16 %v221
    %v262 = vunpack.c.l.b16 %v222
    %v263 = vunpack.c.l.b16 %v223
    %v264 = vunpack.c.l.b16 %v224
    %v265 = vunpack.c.l.b16 %v225
    %v266 = vunpack.c.l.b16 %v226
    %v267 = vunpack.c.l.b16 %v227
    %v268 = vunpack.c.l.b16 %v228
    %v269 = vunpack.c.l.b16 %v229
    %v270 = vunpack.c.l.b16 %v230
    %v271 = vpack.c.b16 %v256, %v255
    %v272 = vpack.c.b16 %v258, %v257
    %v273 = vpack.c.b16 %v260, %v259
    %v274 = vpack.c.b16 %v262, %v261
    %v275 = vpack.c.b16 %v264, %v263
    %v276 = vpack.c.b16 %v266, %v265
    %v277 = vpack.c.b16 %v268, %v267
    %v278 = vpack.c.b16 %v270, %v269
    %287 = vmatprep.subr.bf16.mxu0 0
    %288 = vmatpush1.bf16.msra.mxu0 %v271
    %289 = vmatprep.subr.bf16.mxu0 0
    %290 = vmatpush1.bf16.msra.mxu0 %v272
    %291 = vmatprep.subr.bf16.mxu0 0
    %292 = vmatpush1.bf16.msra.mxu0 %v273
    %293 = vmatprep.subr.bf16.mxu0 0
    %294 = vmatpush1.bf16.msra.mxu0 %v274
    %295 = vmatprep.subr.bf16.mxu0 0
    %296 = vmatpush1.bf16.msra.mxu0 %v275
    %297 = vmatprep.subr.bf16.mxu0 0
    %298 = vmatpush1.bf16.msra.mxu0 %v276
    %299 = vmatprep.subr.bf16.mxu0 0
    %300 = vmatpush1.bf16.msra.mxu0 %v277
    %301 = vmatprep.subr.bf16.mxu0 0
    %302 = vmatpush1.bf16.msra.mxu0 %v278
    %303 = vmatprep.subr.bf16.mxu0 0
    %304 = vmatpush1.bf16.msra.mxu0 0
    %305 = vmatprep.subr.bf16.mxu0 0
    %306 = vmatpush1.bf16.msra.mxu0 0
    %307 = vmatprep.subr.bf16.mxu0 0
    %308 = vmatpush1.bf16.msra.mxu0 0
    %309 = vmatprep.subr.bf16.mxu0 0
    %310 = vmatpush1.bf16.msra.mxu0 0
    %311 = vmatprep.subr.bf16.mxu0 0
    %312 = vmatpush1.bf16.msra.mxu0 0
    %313 = vmatprep.subr.bf16.mxu0 0
    %314 = vmatpush1.bf16.msra.mxu0 0
    %315 = vmatprep.subr.bf16.mxu0 0
    %316 = vmatpush1.bf16.msra.mxu0 0
    %317 = vmatprep.subr.bf16.mxu0 0
    %318 = vmatpush1.bf16.msra.mxu0 0
    %319 = vmatprep.mubr.bf16.mxu0 0
    %320 = vmatmul.mubr.bf16.gmra.mrb[0].mxu0 %v232
    %v321 = vpop.f32.mrb[0].mxu0
    %v322 = vadd.f32 %v237, %v321
    %v323 = vpop.f32.mrb[0].mxu0
    %v324 = vpop.f32.mrb[0].mxu0
    %v325 = vpop.f32.mrb[0].mxu0
    %326 = vdwg.mxu0
    %v327 = vmax.f32 %v322, 0.0
    %v328 = vld [vmem:[#allocation6] sm:$0xf]
    %v329 = vld [vmem:[#allocation6 + $0x4] sm:$0xf]
    %v330 = vld [vmem:[#allocation6 + $0x8] sm:$0xf]
    %v331 = vld [vmem:[#allocation6 + $0xc] sm:$0xf]
    %v332 = vld [vmem:[#allocation6 + $0x10] sm:$0xf]
    %v333 = vld [vmem:[#allocation6 + $0x14] sm:$0xf]
    %v334 = vld [vmem:[#allocation6 + $0x18] sm:$0xf]
    %v335 = vld [vmem:[#allocation6 + $0x1c] sm:$0xf]
    %v336 = vld [vmem:[#allocation6 + $0x20] sm:$0xf]
    %v337 = vld [vmem:[#allocation6 + $0x24] sm:$0xf]
    %v338 = vld [vmem:[#allocation6 + $0x28] sm:$0xf]
    %v339 = vld [vmem:[#allocation6 + $0x2c] sm:$0xf]
    %v340 = vld [vmem:[#allocation6 + $0x30] sm:$0xf]
    %v341 = vld [vmem:[#allocation6 + $0x34] sm:$0xf]
    %v342 = vld [vmem:[#allocation6 + $0x38] sm:$0xf]
    %v343 = vld [vmem:[#allocation6 + $0x3c] sm:$0xf]
    %v344 = vld [vmem:[%s6] sm:$0x1]
    %v345 = vpack.c.bf16 %v327, %v327
    %v347 = vlaneseq
    %v348 = vshrl.u32 %v347, 7
    %v349 = vsub.s32 0, %v348
    %v350 = vrot.slane %v344, %v349
    %v368 = vunpack.c.l.b16 %v328
    %v369 = vunpack.c.l.b16 %v329
    %v370 = vunpack.c.l.b16 %v330
    %v371 = vunpack.c.l.b16 %v331
    %v372 = vunpack.c.l.b16 %v332
    %v373 = vunpack.c.l.b16 %v333
    %v374 = vunpack.c.l.b16 %v334
    %v375 = vunpack.c.l.b16 %v335
    %v376 = vunpack.c.l.b16 %v336
    %v377 = vunpack.c.l.b16 %v337
    %v378 = vunpack.c.l.b16 %v338
    %v379 = vunpack.c.l.b16 %v339
    %v380 = vunpack.c.l.b16 %v340
    %v381 = vunpack.c.l.b16 %v341
    %v382 = vunpack.c.l.b16 %v342
    %v383 = vunpack.c.l.b16 %v343
    %v384 = vpack.c.b16 %v369, %v368
    %v385 = vpack.c.b16 %v371, %v370
    %v386 = vpack.c.b16 %v373, %v372
    %v387 = vpack.c.b16 %v375, %v374
    %v388 = vpack.c.b16 %v377, %v376
    %v389 = vpack.c.b16 %v379, %v378
    %v390 = vpack.c.b16 %v381, %v380
    %v391 = vpack.c.b16 %v383, %v382
    %400 = vmatprep.subr.bf16.mxu0 0
    %401 = vmatpush1.bf16.msra.mxu0 %v384
    %402 = vmatprep.subr.bf16.mxu0 0
    %403 = vmatpush1.bf16.msra.mxu0 %v385
    %404 = vmatprep.subr.bf16.mxu0 0
    %405 = vmatpush1.bf16.msra.mxu0 %v386
    %406 = vmatprep.subr.bf16.mxu0 0
    %407 = vmatpush1.bf16.msra.mxu0 %v387
    %408 = vmatprep.subr.bf16.mxu0 0
    %409 = vmatpush1.bf16.msra.mxu0 %v388
    %410 = vmatprep.subr.bf16.mxu0 0
    %411 = vmatpush1.bf16.msra.mxu0 %v389
    %412 = vmatprep.subr.bf16.mxu0 0
    %413 = vmatpush1.bf16.msra.mxu0 %v390
    %414 = vmatprep.subr.bf16.mxu0 0
    %415 = vmatpush1.bf16.msra.mxu0 %v391
    %416 = vmatprep.subr.bf16.mxu0 0
    %417 = vmatpush1.bf16.msra.mxu0 0
    %418 = vmatprep.subr.bf16.mxu0 0
    %419 = vmatpush1.bf16.msra.mxu0 0
    %420 = vmatprep.subr.bf16.mxu0 0
    %421 = vmatpush1.bf16.msra.mxu0 0
    %422 = vmatprep.subr.bf16.mxu0 0
    %423 = vmatpush1.bf16.msra.mxu0 0
    %424 = vmatprep.subr.bf16.mxu0 0
    %425 = vmatpush1.bf16.msra.mxu0 0
    %426 = vmatprep.subr.bf16.mxu0 0
    %427 = vmatpush1.bf16.msra.mxu0 0
    %428 = vmatprep.subr.bf16.mxu0 0
    %429 = vmatpush1.bf16.msra.mxu0 0
    %430 = vmatprep.subr.bf16.mxu0 0
    %431 = vmatpush1.bf16.msra.mxu0 0
    %432 = vmatprep.mubr.bf16.mxu0 0
    %433 = vmatmul.mubr.bf16.gmra.mrb[0].mxu0 %v345
    %v434 = vpop.f32.mrb[0].mxu0
    %v435 = vadd.f32 %v350, %v434
    %v436 = vpop.f32.mrb[0].mxu0
    %v437 = vpop.f32.mrb[0].mxu0
    %v438 = vpop.f32.mrb[0].mxu0
    %439 = vdwg.mxu0
    %v440 = vlaneseq
    %v441 = vand.u32 %v440, 127
    %vm442 = vcmp.lt.s32.totalorder %v441, 7
    %vm443 = vcmp.ge.s32.totalorder %v441, 0
    %vm444 = vcmp.lt.s32.totalorder %v441, 4
    %vm445 = vmand %vm443, %vm444
    %v446 = vsel %vm445, 1, 0
    %vm447 = vcmp.eq.s32.totalorder %v446, 1
    %v448 = vsel %vm447, %v435, -inf
    %449 = vmax.xlane.f32.xlu0 %v448
    %v450 = vpop.xlane.xlu0 %449
    %v451 = vsel %vm447, %v450, 0.0
    %vm452 = vcmp.ge.s32.totalorder %v441, 4
    %vm453 = vmand %vm452, %vm442
    %v454 = vsel %vm453, 1, 0
    %vm455 = vcmp.eq.s32.totalorder %v454, 1
    %v456 = vsel %vm455, %v435, -inf
    %457 = vmax.xlane.f32.xlu0 %v456
    %v458 = vpop.xlane.xlu0 %457
    %v459 = vsel %vm455, %v458, %v451
    %v460 = vsub.f32 %v435, %v459
    %v461 = vmul.f32 %v460, 1.442695
    %v462 = vpow.pop %v461
    %v463 = vsel %vm442, 1, 0
    %vm464 = vcmp.eq.s32.totalorder %v463, 1
    %v465 = vsel %vm464, %v462, 0.0
    %v466 = vld [vmem:[#allocation7] sm:$0xff]
    %v467 = vld [vmem:[#allocation7 + $0x8] sm:$0xff]
    %v468 = vld [vmem:[#allocation7 + $0x10] sm:$0xff]
    %v469 = vld [vmem:[#allocation7 + $0x18] sm:$0xff]
    %v470 = vld [vmem:[#allocation7 + $0x20] sm:$0xff]
    %v471 = vld [vmem:[#allocation7 + $0x28] sm:$0xff]
    %v472 = vld [vmem:[#allocation7 + $0x30] sm:$0xff]
    %v473 = vld [vmem:[#allocation7 + $0x38] sm:$0xff]
    %v474 = vld [vmem:[#allocation7 + $0x40] sm:$0xff]
    %v475 = vld [vmem:[#allocation7 + $0x48] sm:$0xff]
    %v476 = vld [vmem:[#allocation7 + $0x50] sm:$0xff]
    %v477 = vld [vmem:[#allocation7 + $0x58] sm:$0xff]
    %v478 = vld [vmem:[#allocation7 + $0x60] sm:$0xff]
    %v479 = vld [vmem:[#allocation7 + $0x68] sm:$0xff]
    %v480 = vld [vmem:[#allocation7 + $0x70] sm:$0xff]
    %v481 = vld [vmem:[#allocation7 + $0x78] sm:$0xff]
    %482 = vmatprep.subr.mxu0 0.0
    %483 = vmatpush1.msra.mxu0 %v466
    %484 = vmatprep.subr.mxu0 0.0
    %485 = vmatpush1.msra.mxu0 %v467
    %486 = vmatprep.subr.mxu0 0.0
    %487 = vmatpush1.msra.mxu0 %v468
    %488 = vmatprep.subr.mxu0 0.0
    %489 = vmatpush1.msra.mxu0 %v469
    %490 = vmatprep.subr.mxu0 0.0
    %491 = vmatpush1.msra.mxu0 %v470
    %492 = vmatprep.subr.mxu0 0.0
    %493 = vmatpush1.msra.mxu0 %v471
    %494 = vmatprep.subr.mxu0 0.0
    %495 = vmatpush1.msra.mxu0 %v472
    %496 = vmatprep.subr.mxu0 0.0
    %497 = vmatpush1.msra.mxu0 %v473
    %498 = vmatprep.subr.mxu0 0.0
    %499 = vmatpush1.msra.mxu0 %v474
    %500 = vmatprep.subr.mxu0 0.0
    %501 = vmatpush1.msra.mxu0 %v475
    %502 = vmatprep.subr.mxu0 0.0
    %503 = vmatpush1.msra.mxu0 %v476
    %504 = vmatprep.subr.mxu0 0.0
    %505 = vmatpush1.msra.mxu0 %v477
    %506 = vmatprep.subr.mxu0 0.0
    %507 = vmatpush1.msra.mxu0 %v478
    %508 = vmatprep.subr.mxu0 0.0
    %509 = vmatpush1.msra.mxu0 %v479
    %510 = vmatprep.subr.mxu0 0.0
    %511 = vmatpush1.msra.mxu0 %v480
    %512 = vmatprep.subr.mxu0 0.0
    %513 = vmatpush1.msra.mxu0 %v481
    %514 = vmatprep.subr.mxu0 0.0
    %515 = vmatpush1.msra.mxu0 0.0
    %516 = vmatprep.subr.mxu0 0.0
    %517 = vmatpush1.msra.mxu0 0.0
    %518 = vmatprep.subr.mxu0 0.0
    %519 = vmatpush1.msra.mxu0 0.0
    %520 = vmatprep.subr.mxu0 0.0
    %521 = vmatpush1.msra.mxu0 0.0
    %522 = vmatprep.subr.mxu0 0.0
    %523 = vmatpush1.msra.mxu0 0.0
    %524 = vmatprep.subr.mxu0 0.0
    %525 = vmatpush1.msra.mxu0 0.0
    %526 = vmatprep.subr.mxu0 0.0
    %527 = vmatpush1.msra.mxu0 0.0
    %528 = vmatprep.subr.mxu0 0.0
    %529 = vmatpush1.msra.mxu0 0.0
    %530 = vmatprep.subr.mxu0 0.0
    %531 = vmatpush1.msra.mxu0 0.0
    %532 = vmatprep.subr.mxu0 0.0
    %533 = vmatpush1.msra.mxu0 0.0
    %534 = vmatprep.subr.mxu0 0.0
    %535 = vmatpush1.msra.mxu0 0.0
    %536 = vmatprep.subr.mxu0 0.0
    %537 = vmatpush1.msra.mxu0 0.0
    %538 = vmatprep.subr.mxu0 0.0
    %539 = vmatpush1.msra.mxu0 0.0
    %540 = vmatprep.subr.mxu0 0.0
    %541 = vmatpush1.msra.mxu0 0.0
    %542 = vmatprep.subr.mxu0 0.0
    %543 = vmatpush1.msra.mxu0 0.0
    %544 = vmatprep.subr.mxu0 0.0
    %545 = vmatpush1.msra.mxu0 0.0
    %546 = vmatprep.mubr.f32.mxu0 0.0
    %547 = vmatmul.mubr.f32.gmra.mrb[0].mxu0 %v465
    %v548 = vpop.f32.mrb[0].mxu0
    %v549 = vadd.f32 0.0, %v548
    %v550 = vpop.f32.mrb[0].mxu0
    %551 = vdwg.mxu0
    %vm552 = vcmp.gt.f32.partialorder %v549, 0.0
    %v553 = vsel %vm552, %v549, 1.0
    %v554 = vrcp.pop %v553
    %v555 = vsel %vm552, %v554, 0.0
    %v556 = vld [vmem:[#allocation9] sm:$0xff]
    %v557 = vld [vmem:[#allocation9 + $0x8] sm:$0xff]
    %v558 = vld [vmem:[#allocation9 + $0x10] sm:$0xff]
    %v559 = vld [vmem:[#allocation9 + $0x18] sm:$0xff]
    %v560 = vld [vmem:[#allocation9 + $0x20] sm:$0xff]
    %v561 = vld [vmem:[#allocation9 + $0x28] sm:$0xff]
    %v562 = vld [vmem:[#allocation9 + $0x30] sm:$0xff]
    %v563 = vld [vmem:[#allocation9 + $0x38] sm:$0xff]
    %v564 = vld [vmem:[#allocation9 + $0x40] sm:$0xff]
    %v565 = vld [vmem:[#allocation9 + $0x48] sm:$0xff]
    %v566 = vld [vmem:[#allocation9 + $0x50] sm:$0xff]
    %v567 = vld [vmem:[#allocation9 + $0x58] sm:$0xff]
    %v568 = vld [vmem:[#allocation9 + $0x60] sm:$0xff]
    %v569 = vld [vmem:[#allocation9 + $0x68] sm:$0xff]
    %v570 = vld [vmem:[#allocation9 + $0x70] sm:$0xff]
    %v571 = vld [vmem:[#allocation9 + $0x78] sm:$0xff]
    %572 = vmatprep.subr.mxu0 0.0
    %573 = vmatpush1.msra.mxu0 %v556
    %574 = vmatprep.subr.mxu0 0.0
    %575 = vmatpush1.msra.mxu0 %v557
    %576 = vmatprep.subr.mxu0 0.0
    %577 = vmatpush1.msra.mxu0 %v558
    %578 = vmatprep.subr.mxu0 0.0
    %579 = vmatpush1.msra.mxu0 %v559
    %580 = vmatprep.subr.mxu0 0.0
    %581 = vmatpush1.msra.mxu0 %v560
    %582 = vmatprep.subr.mxu0 0.0
    %583 = vmatpush1.msra.mxu0 %v561
    %584 = vmatprep.subr.mxu0 0.0
    %585 = vmatpush1.msra.mxu0 %v562
    %586 = vmatprep.subr.mxu0 0.0
    %587 = vmatpush1.msra.mxu0 %v563
    %588 = vmatprep.subr.mxu0 0.0
    %589 = vmatpush1.msra.mxu0 %v564
    %590 = vmatprep.subr.mxu0 0.0
    %591 = vmatpush1.msra.mxu0 %v565
    %592 = vmatprep.subr.mxu0 0.0
    %593 = vmatpush1.msra.mxu0 %v566
    %594 = vmatprep.subr.mxu0 0.0
    %595 = vmatpush1.msra.mxu0 %v567
    %596 = vmatprep.subr.mxu0 0.0
    %597 = vmatpush1.msra.mxu0 %v568
    %598 = vmatprep.subr.mxu0 0.0
    %599 = vmatpush1.msra.mxu0 %v569
    %600 = vmatprep.subr.mxu0 0.0
    %601 = vmatpush1.msra.mxu0 %v570
    %602 = vmatprep.subr.mxu0 0.0
    %603 = vmatpush1.msra.mxu0 %v571
    %604 = vmatprep.subr.mxu0 0.0
    %605 = vmatpush1.msra.mxu0 0.0
    %606 = vmatprep.subr.mxu0 0.0
    %607 = vmatpush1.msra.mxu0 0.0
    %608 = vmatprep.subr.mxu0 0.0
    %609 = vmatpush1.msra.mxu0 0.0
    %610 = vmatprep.subr.mxu0 0.0
    %611 = vmatpush1.msra.mxu0 0.0
    %612 = vmatprep.subr.mxu0 0.0
    %613 = vmatpush1.msra.mxu0 0.0
    %614 = vmatprep.subr.mxu0 0.0
    %615 = vmatpush1.msra.mxu0 0.0
    %616 = vmatprep.subr.mxu0 0.0
    %617 = vmatpush1.msra.mxu0 0.0
    %618 = vmatprep.subr.mxu0 0.0
    %619 = vmatpush1.msra.mxu0 0.0
    %620 = vmatprep.subr.mxu0 0.0
    %621 = vmatpush1.msra.mxu0 0.0
    %622 = vmatprep.subr.mxu0 0.0
    %623 = vmatpush1.msra.mxu0 0.0
    %624 = vmatprep.subr.mxu0 0.0
    %625 = vmatpush1.msra.mxu0 0.0
    %626 = vmatprep.subr.mxu0 0.0
    %627 = vmatpush1.msra.mxu0 0.0
    %628 = vmatprep.subr.mxu0 0.0
    %629 = vmatpush1.msra.mxu0 0.0
    %630 = vmatprep.subr.mxu0 0.0
    %631 = vmatpush1.msra.mxu0 0.0
    %632 = vmatprep.subr.mxu0 0.0
    %633 = vmatpush1.msra.mxu0 0.0
    %634 = vmatprep.subr.mxu0 0.0
    %635 = vmatpush1.msra.mxu0 0.0
    %636 = vmatprep.mubr.f32.mxu0 0.0
    %637 = vmatmul.mubr.f32.gmra.mrb[0].mxu0 %v555
    %v638 = vpop.f32.mrb[0].mxu0
    %v639 = vadd.f32 0.0, %v638
    %v640 = vpop.f32.mrb[0].mxu0
    %641 = vdwg.mxu0
    %v642 = vmul.f32 %v465, %v639
    %643 = vst [vmem:[%s9] sm:$0xff] %v642
    // Predicated region
    $region58: #{apply.1} parent=1 // pred_check
      _
    $region59: #{apply.1} parent=1 // pred_check_branch
      %645 = sbr.rel (0) target = $region61
    $region60: #{apply.1} parent=1 // pred_region
      _
    $region61: #{apply.1} parent=1 // pred_fallthru
      _
    // Predicated region
    $region62: #{apply.1} parent=1 // pred_check
      _
    $region63: #{apply.1} parent=1 // pred_check_branch
      %647 = sbr.rel (0) target = $region65
    $region64: #{apply.1} parent=1 // pred_region
      _
    $region65: #{apply.1} parent=1 // pred_fallthru
      _
    %648 = vsyncpa [#allocation3], 1
    %649 = vsyncpa [#allocation5], 1
    %650 = vsyncpa [#allocation8], 1

</llo_original>
